<compile_context>
chip_gen: v7x
topology: tpu7x:2x2x1
jax: 0.10.0
libtpu: 0.0.40
codegen_flags: <defaults>
</compile_context>

<pallas_src>
import functools
import math

import jax
import jax.numpy as jnp
from jax import lax
from jax.experimental import pallas as pl
from jax.experimental.pallas import tpu as pltpu


# ----------------------------- small math helpers ------------------------------

_GELU_C = math.sqrt(2.0 / math.pi)


def _gelu_new(x):
    # GPT2 "gelu_new": 0.5*x*(1 + tanh(sqrt(2/pi)*(x + 0.044715*x^3)))
    return 0.5 * x * (1.0 + jnp.tanh(_GELU_C * (x + 0.044715 * x * x * x)))


def _layernorm(h, w, b, eps=1e-5):
    mu = jnp.mean(h, axis=-1, keepdims=True)
    var = jnp.mean((h - mu) ** 2, axis=-1, keepdims=True)
    return (h - mu) * lax.rsqrt(var + eps) * w + b


# ----------------------------- parameter slab packing ---------------------------

def _r8(n):
    return ((n + 7) // 8) * 8


def param_layout(hidden, inner, max_pos):
    """Static row offsets of every parameter inside the packed (rows, width) f32 slab.
    c_attn is pre-split into its Q and KV halves so every in-kernel view is lane-aligned."""
    width = ((max(2 * hidden, inner, hidden, 128) + 127) // 128) * 128
    off, r = {}, 0
    off["wpe"] = r;  r += _r8(max_pos)        # (max_pos, H)
    off["wq"] = r;   r += _r8(hidden)         # (H, H)    c_attn W[:, :H]
    off["wkv"] = r;  r += _r8(hidden)         # (H, 2H)   c_attn W[:, H:]
    off["wo"] = r;   r += _r8(hidden)         # (H, H)    attn c_proj
    off["wfc"] = r;  r += _r8(hidden)         # (H, I)    mlp c_fc
    off["wmp"] = r;  r += _r8(inner)          # (I, H)    mlp c_proj
    off["vec"] = r;  r += _r8(11)             # 11 bias / LN rows (see pack_params)
    off["rows"] = _r8(r)
    off["width"] = width
    return off


def pack_params(params, hidden, inner, max_pos):
    """Pack all parameters into ONE lane-dense f32 slab (done once, outside the per-step hot
    path) so the kernel issues a single parameter DMA instead of 18 tiny ones."""
    H, I = hidden, inner
    L = param_layout(H, I, max_pos)
    slab = jnp.zeros((L["rows"], L["width"]), jnp.float32)

    def put(s, row, arr):
        arr = jnp.asarray(arr, jnp.float32)
        if arr.ndim == 1:
            arr = arr.reshape(1, -1)
        return s.at[row:row + arr.shape[0], 0:arr.shape[1]].set(arr)

    slab = put(slab, L["wpe"], params["wpe"])
    slab = put(slab, L["wq"], params["c_attn_w"][:, :H])
    slab = put(slab, L["wkv"], params["c_attn_w"][:, H:])
    slab = put(slab, L["wo"], params["c_proj_w"])
    slab = put(slab, L["wfc"], params["fc_w"])
    slab = put(slab, L["wmp"], params["mlp_proj_w"])
    v = L["vec"]
    slab = put(slab, v + 0, params["ln1_w"])
    slab = put(slab, v + 1, params["ln1_b"])
    slab = put(slab, v + 2, params["ln2_w"])
    slab = put(slab, v + 3, params["ln2_b"])
    slab = put(slab, v + 4, params["lnf_w"])
    slab = put(slab, v + 5, params["lnf_b"])
    slab = put(slab, v + 6, jnp.asarray(params["c_attn_b"]).reshape(1, -1)[:, :H])   # bq
    slab = put(slab, v + 7, jnp.asarray(params["c_attn_b"]).reshape(1, -1)[:, H:])   # bkv
    slab = put(slab, v + 8, params["c_proj_b"])
    slab = put(slab, v + 9, params["fc_b"])
    slab = put(slab, v + 10, params["mlp_proj_b"])
    return slab


# ----------------------------- Pallas kernel ------------------------------------

def core_step_kernel(
    slab_ref,      # (rows, width) packed parameters                  VMEM
    g_ref,         # (B, H)        current glimpse g_t                VMEM
    hist_ref,      # (B, MP, H)    fixed-size glimpse history         VMEM (aliased w/ output 1)
    t_ref,         # (1,)          current timestep (int32)           SMEM
    ht_ref,        # (B, H)        out: hidden state h_t
    newhist_ref,   # (B, MP, H)    out: updated history
    *, layout, inner, n_heads,
):
    B, MP, H = hist_ref.shape
    I = inner
    BMP = B * MP
    hd = H // n_heads
    scale = 1.0 / math.sqrt(hd)
    L = layout
    t = t_ref[0]

    # ---- parameter views sliced from the single packed slab (static views, no extra DMAs) ----
    wpe = slab_ref[L["wpe"]:L["wpe"] + MP, 0:H]                   # (MP, H)
    wq = slab_ref[L["wq"]:L["wq"] + H, 0:H]                       # (H, H)
    wkv = slab_ref[L["wkv"]:L["wkv"] + H, 0:2 * H]                # (H, 2H)
    wo = slab_ref[L["wo"]:L["wo"] + H, 0:H]                       # (H, H)
    wfc = slab_ref[L["wfc"]:L["wfc"] + H, 0:I]                    # (H, I)
    wmp = slab_ref[L["wmp"]:L["wmp"] + I, 0:H]                    # (I, H)
    v0 = L["vec"]
    ln1w = slab_ref[v0 + 0:v0 + 1, 0:H]
    ln1b = slab_ref[v0 + 1:v0 + 2, 0:H]
    ln2w = slab_ref[v0 + 2:v0 + 3, 0:H]
    ln2b = slab_ref[v0 + 3:v0 + 4, 0:H]
    lnfw = slab_ref[v0 + 4:v0 + 5, 0:H]
    lnfb = slab_ref[v0 + 5:v0 + 6, 0:H]
    bq = slab_ref[v0 + 6:v0 + 7, 0:H]
    bkv = slab_ref[v0 + 7:v0 + 8, 0:2 * H]
    bo = slab_ref[v0 + 8:v0 + 9, 0:H]
    bfc = slab_ref[v0 + 9:v0 + 10, 0:I]
    bmp = slab_ref[v0 + 10:v0 + 11, 0:H]

    # ---- splice g_t into row t of the fixed-size history (built in registers, stored once) ----
    g = g_ref[...]                                                # (B, H)
    hist = hist_ref[...]                                          # (B, MP, H)
    row = lax.broadcasted_iota(jnp.int32, (1, MP, 1), 1)
    seq = jnp.where(row == t, g[:, None, :], hist)                # (B, MP, H)
    newhist_ref[...] = seq

    # ---- position embeddings ----
    x_all = (seq + wpe[None, :, :]).reshape(BMP, H)               # all positions (feeds K/V only)
    wpe_t = slab_ref[pl.ds(L["wpe"] + t, 1), :][:, 0:H]           # (1, H) current position's wpe
    x_t = g + wpe_t                                               # (B, H) last-position activation

    # ---- attention: K/V for every position, Q only for the last (needed) position ----
    h1_all = _layernorm(x_all, ln1w, ln1b)                        # (BMP, H)
    kv = jnp.dot(h1_all, wkv, preferred_element_type=jnp.float32) + bkv       # (BMP, 2H)
    k = kv[:, 0:H]
    v = kv[:, H:2 * H]

    h1_t = _layernorm(x_t, ln1w, ln1b)                            # (B, H)
    q = (jnp.dot(h1_t, wq, preferred_element_type=jnp.float32) + bq) * scale  # scale folded into q

    # Validity mask, built in-kernel from iota (no HBM constant): query b attends to flattened
    # key index i iff i in [b*MP, b*MP + t].  The query IS the last valid position, so this
    # "same batch & key_pos <= t" test also covers causality.
    ki = lax.broadcasted_iota(jnp.int32, (B, BMP), 1)
    lo = lax.broadcasted_iota(jnp.int32, (B, BMP), 0) * MP
    valid = (ki >= lo) & (ki <= lo + t)

    heads = []
    for h in range(n_heads):                                      # n_head == 1 per config -> 1 iter
        sl = slice(h * hd, (h + 1) * hd)
        s = lax.dot_general(q[:, sl], k[:, sl], (((1,), (1,)), ((), ())),
                            preferred_element_type=jnp.float32)   # (B, BMP)
        s = jnp.where(valid, s, -1e30)
        s = s - jnp.max(s, axis=-1, keepdims=True)
        p = jnp.exp(s)
        p = p * pl.reciprocal(jnp.sum(p, axis=-1, keepdims=True), approx=True)
        heads.append(jnp.dot(p, v[:, sl], preferred_element_type=jnp.float32))  # (B, hd)
    attn = heads[0] if n_heads == 1 else jnp.concatenate(heads, axis=-1)         # (B, H)

    x_t = x_t + jnp.dot(attn, wo, preferred_element_type=jnp.float32) + bo       # residual

    # ---- MLP block + final layer norm, all on (B, H) rows only ----
    h2 = _layernorm(x_t, ln2w, ln2b)
    f = jnp.dot(h2, wfc, preferred_element_type=jnp.float32) + bfc
    f = _gelu_new(f)
    x_t = x_t + jnp.dot(f, wmp, preferred_element_type=jnp.float32) + bmp        # residual

    ht_ref[...] = _layernorm(x_t, lnfw, lnfb)


# ----------------------------- wrapper -------------------------------------------

def make_core_step_fn(hidden, inner, max_pos, n_heads=1):
    """Returns step(slab, g_t, hist, t) -> (h_t, new_hist).

    `hist` is a fixed-size (B, max_pos, hidden) buffer holding the glimpse history (rows >= t
    are ignored); it is aliased in place with the `new_hist` output, and `t` is a (1,) int32
    array with the current timestep, so the same compiled kernel serves every timestep."""
    assert hidden % n_heads == 0
    layout = param_layout(hidden, inner, max_pos)
    kernel = functools.partial(core_step_kernel, layout=layout, inner=inner, n_heads=n_heads)

    @jax.jit
    def step(slab, g_t, hist, t):
        B, H = g_t.shape
        MP = hist.shape[1]
        BMP = B * MP
        I = inner
        flops = 2 * (BMP * H * 2 * H        # kv
                     + B * H * H            # q
                     + B * BMP * H * 2      # scores + p@v
                     + B * H * H            # attn c_proj
                     + B * H * I * 2)       # mlp
        transcendentals = B * BMP + B * I
        bytes_accessed = 4 * (slab.size + g_t.size + 2 * hist.size + B * H) + 4

        return pl.pallas_call(
            kernel,
            out_shape=(jax.ShapeDtypeStruct((B, H), jnp.float32),
                       jax.ShapeDtypeStruct((B, MP, H), jnp.float32)),
            # No grid: a single step has nothing to pipeline (no double-buffering overhead).
            in_specs=[
                pl.BlockSpec(memory_space=pltpu.MemorySpace.VMEM),   # packed parameter slab
                pl.BlockSpec(memory_space=pltpu.MemorySpace.VMEM),   # g_t
                pl.BlockSpec(memory_space=pltpu.MemorySpace.VMEM),   # history buffer
                pl.BlockSpec(memory_space=pltpu.MemorySpace.SMEM),   # t (scalar)
            ],
            out_specs=(pl.BlockSpec(memory_space=pltpu.MemorySpace.VMEM),
                       pl.BlockSpec(memory_space=pltpu.MemorySpace.VMEM)),
            input_output_aliases={2: 1},       # history buffer updated in place
            cost_estimate=pl.CostEstimate(flops=flops,
                                          transcendentals=transcendentals,
                                          bytes_accessed=bytes_accessed),
        )(slab, g_t, hist, t)

    return step


# ----------------------------- pure-JAX reference (HF GPT2 semantics) -------------

def gpt2_ref(params, seq, n_heads=1):
    B, Lq, H = seq.shape
    hd = H // n_heads

    def ln(h, w, b):
        w = jnp.asarray(w).reshape(1, 1, -1)
        b = jnp.asarray(b).reshape(1, 1, -1)
        mu = jnp.mean(h, -1, keepdims=True)
        var = jnp.mean((h - mu) ** 2, -1, keepdims=True)
        return (h - mu) * lax.rsqrt(var + 1e-5) * w + b

    x = seq + params["wpe"][:Lq][None]
    h1 = ln(x, params["ln1_w"], params["ln1_b"])
    qkv = h1 @ params["c_attn_w"] + jnp.asarray(params["c_attn_b"]).reshape(1, 1, -1)
    q, k, v = qkv[..., :H], qkv[..., H:2 * H], qkv[..., 2 * H:]
    causal = jnp.tril(jnp.ones((Lq, Lq), bool))
    outs = []
    for h in range(n_heads):
        sl = slice(h * hd, (h + 1) * hd)
        s = jnp.einsum("bqd,bkd->bqk", q[..., sl], k[..., sl],
                       preferred_element_type=jnp.float32) / math.sqrt(hd)
        s = jnp.where(causal[None], s, -1e30)
        p = jax.nn.softmax(s, axis=-1)
        outs.append(jnp.einsum("bqk,bkd->bqd", p, v[..., sl],
                               preferred_element_type=jnp.float32))
    a = outs[0] if n_heads == 1 else jnp.concatenate(outs, -1)
    a = a @ params["c_proj_w"] + jnp.asarray(params["c_proj_b"]).reshape(1, 1, -1)
    x = x + a
    h2 = ln(x, params["ln2_w"], params["ln2_b"])
    f = _gelu_new(h2 @ params["fc_w"] + jnp.asarray(params["fc_b"]).reshape(1, 1, -1))
    f = f @ params["mlp_proj_w"] + jnp.asarray(params["mlp_proj_b"]).reshape(1, 1, -1)
    x = x + f
    x = ln(x, params["lnf_w"], params["lnf_b"])
    return x[:, -1, :]


def init_gpt2_params(key, hidden, inner, max_pos=6, std=0.02):
    """Deterministic single-layer GPT2 parameters (GPT2 init: N(0, 0.02), zero biases)."""
    ks = jax.random.split(key, 5)
    f32 = jnp.float32
    return {
        "wpe":        std * jax.random.normal(ks[0], (max_pos, hidden), f32),
        "ln1_w":      jnp.ones((1, hidden), f32),
        "ln1_b":      jnp.zeros((1, hidden), f32),
        "c_attn_w":   std * jax.random.normal(ks[1], (hidden, 3 * hidden), f32),
        "c_attn_b":   jnp.zeros((1, 3 * hidden), f32),
        "c_proj_w":   std * jax.random.normal(ks[2], (hidden, hidden), f32),
        "c_proj_b":   jnp.zeros((1, hidden), f32),
        "ln2_w":      jnp.ones((1, hidden), f32),
        "ln2_b":      jnp.zeros((1, hidden), f32),
        "fc_w":       std * jax.random.normal(ks[3], (hidden, inner), f32),
        "fc_b":       jnp.zeros((1, inner), f32),
        "mlp_proj_w": std * jax.random.normal(ks[4], (inner, hidden), f32),
        "mlp_proj_b": jnp.zeros((1, hidden), f32),
        "lnf_w":      jnp.ones((1, hidden), f32),
        "lnf_b":      jnp.zeros((1, hidden), f32),
    }


# ----------------------------- Main ------------------------------------------------

if __name__ == "__main__":
    B, HIDDEN, INNER, N_HEADS, MAX_POS = 2, 32, 64, 1, 6   # config: n_head=1, n_inner=64, max_pos=6

    root = jax.random.PRNGKey(0)
    k_p, k_g = jax.random.split(root)
    params = init_gpt2_params(k_p, HIDDEN, INNER, max_pos=MAX_POS)
    slab = pack_params(params, HIDDEN, INNER, MAX_POS)      # packed ONCE, reused every step

    step = make_core_step_fn(HIDDEN, INNER, MAX_POS, n_heads=N_HEADS)

    hist = jnp.zeros((B, MAX_POS, HIDDEN), jnp.float32)     # fixed-size glimpse history buffer
    glimpses = jax.random.normal(k_g, (MAX_POS, B, HIDDEN), jnp.float32)

    collected = []
    h_t = None
    for t in range(MAX_POS):                                # full rollout: one compile serves all t
        g_t = glimpses[t]
        h_t, hist = step(slab, g_t, hist, jnp.array([t], jnp.int32))
        collected.append(g_t)

        # reference: true variable-length GPT2 forward on the accumulated glimpses
        h_ref = gpt2_ref(params, jnp.stack(collected, axis=1), n_heads=N_HEADS)
        err = float(jnp.max(jnp.abs(h_t - h_ref)))
        assert jnp.allclose(h_t, h_ref, atol=2e-2, rtol=2e-2), (t, err)
        # state update check: rows [0..t] of the history hold the glimpses seen so far
        assert jnp.allclose(hist[:, :t + 1, :], jnp.stack(collected, axis=1))

    jax.block_until_ready((h_t, hist))
    assert h_t.shape == (B, HIDDEN)
    assert hist.shape == (B, MAX_POS, HIDDEN)
    assert jnp.all(jnp.isfinite(h_t)) and jnp.all(jnp.isfinite(hist))
    print("KERNEL_OK")
</pallas_src>

<mosaic_0001>
module attributes {stable_mosaic.version = 11 : i64} {
  func.func @core_step_kernel(%arg0: memref<216x128xf32, #tpu.memory_space<vmem>>, %arg1: memref<2x32xf32, #tpu.memory_space<vmem>>, %arg2: memref<2x6x32xf32, #tpu.memory_space<vmem>>, %arg3: memref<1xi32, #tpu.memory_space<smem>>, %arg4: memref<2x32xf32, #tpu.memory_space<vmem>>, %arg5: memref<2x6x32xf32, #tpu.memory_space<vmem>>) attributes {dimension_semantics = [], scalar_prefetch = 0 : i64, scratch_operands = 0 : i64, tpu.core_type = #tpu.core_type<tc>} {
    %c0 = arith.constant 0 : index
    %0 = memref.load %arg3[%c0] : memref<1xi32, #tpu.memory_space<smem>>
    %c0_0 = arith.constant 0 : index
    %c0_1 = arith.constant 0 : index
    %1 = vector.load %arg0[%c0_0, %c0_1] : memref<216x128xf32, #tpu.memory_space<vmem>>, vector<6x32xf32>
    %c8 = arith.constant 8 : index
    %c0_2 = arith.constant 0 : index
    %2 = vector.load %arg0[%c8, %c0_2] : memref<216x128xf32, #tpu.memory_space<vmem>>, vector<32x32xf32>
    %c40 = arith.constant 40 : index
    %c0_3 = arith.constant 0 : index
    %3 = vector.load %arg0[%c40, %c0_3] : memref<216x128xf32, #tpu.memory_space<vmem>>, vector<32x64xf32>
    %c72 = arith.constant 72 : index
    %c0_4 = arith.constant 0 : index
    %4 = vector.load %arg0[%c72, %c0_4] : memref<216x128xf32, #tpu.memory_space<vmem>>, vector<32x32xf32>
    %c104 = arith.constant 104 : index
    %c0_5 = arith.constant 0 : index
    %5 = vector.load %arg0[%c104, %c0_5] : memref<216x128xf32, #tpu.memory_space<vmem>>, vector<32x64xf32>
    %c136 = arith.constant 136 : index
    %c0_6 = arith.constant 0 : index
    %6 = vector.load %arg0[%c136, %c0_6] : memref<216x128xf32, #tpu.memory_space<vmem>>, vector<64x32xf32>
    %c200 = arith.constant 200 : index
    %c0_7 = arith.constant 0 : index
    %7 = vector.load %arg0[%c200, %c0_7] : memref<216x128xf32, #tpu.memory_space<vmem>>, vector<1x32xf32>
    %c201 = arith.constant 201 : index
    %c0_8 = arith.constant 0 : index
    %8 = vector.load %arg0[%c201, %c0_8] : memref<216x128xf32, #tpu.memory_space<vmem>>, vector<1x32xf32>
    %c202 = arith.constant 202 : index
    %c0_9 = arith.constant 0 : index
    %9 = vector.load %arg0[%c202, %c0_9] : memref<216x128xf32, #tpu.memory_space<vmem>>, vector<1x32xf32>
    %c203 = arith.constant 203 : index
    %c0_10 = arith.constant 0 : index
    %10 = vector.load %arg0[%c203, %c0_10] : memref<216x128xf32, #tpu.memory_space<vmem>>, vector<1x32xf32>
    %c204 = arith.constant 204 : index
    %c0_11 = arith.constant 0 : index
    %11 = vector.load %arg0[%c204, %c0_11] : memref<216x128xf32, #tpu.memory_space<vmem>>, vector<1x32xf32>
    %c205 = arith.constant 205 : index
    %c0_12 = arith.constant 0 : index
    %12 = vector.load %arg0[%c205, %c0_12] : memref<216x128xf32, #tpu.memory_space<vmem>>, vector<1x32xf32>
    %c206 = arith.constant 206 : index
    %c0_13 = arith.constant 0 : index
    %13 = vector.load %arg0[%c206, %c0_13] : memref<216x128xf32, #tpu.memory_space<vmem>>, vector<1x32xf32>
    %c207 = arith.constant 207 : index
    %c0_14 = arith.constant 0 : index
    %14 = vector.load %arg0[%c207, %c0_14] : memref<216x128xf32, #tpu.memory_space<vmem>>, vector<1x64xf32>
    %c208 = arith.constant 208 : index
    %c0_15 = arith.constant 0 : index
    %15 = vector.load %arg0[%c208, %c0_15] : memref<216x128xf32, #tpu.memory_space<vmem>>, vector<1x32xf32>
    %c209 = arith.constant 209 : index
    %c0_16 = arith.constant 0 : index
    %16 = vector.load %arg0[%c209, %c0_16] : memref<216x128xf32, #tpu.memory_space<vmem>>, vector<1x64xf32>
    %c210 = arith.constant 210 : index
    %c0_17 = arith.constant 0 : index
    %17 = vector.load %arg0[%c210, %c0_17] : memref<216x128xf32, #tpu.memory_space<vmem>>, vector<1x32xf32>
    %c0_18 = arith.constant 0 : index
    %c0_19 = arith.constant 0 : index
    %18 = vector.load %arg1[%c0_18, %c0_19] : memref<2x32xf32, #tpu.memory_space<vmem>>, vector<2x32xf32>
    %c0_20 = arith.constant 0 : index
    %c0_21 = arith.constant 0 : index
    %c0_22 = arith.constant 0 : index
    %19 = vector.load %arg2[%c0_20, %c0_21, %c0_22] : memref<2x6x32xf32, #tpu.memory_space<vmem>>, vector<2x6x32xf32>
    %20 = tpu.iota {dimensions = array<i32: 1>} : vector<1x6x1xi32>
    %21 = vector.broadcast %0 : i32 to vector<1x6x1xi32>
    %22 = arith.cmpi eq, %20, %21 : vector<1x6x1xi32>
    %23 = vector.shape_cast %18 : vector<2x32xf32> to vector<2x1x32xf32>
    %24 = vector.shape_cast %22 : vector<1x6x1xi1> to vector<1x6x1xi1>
    %25 = vector.broadcast %24 : vector<1x6x1xi1> to vector<2x6x32xi1>
    %26 = vector.shape_cast %23 : vector<2x1x32xf32> to vector<2x1x32xf32>
    %27 = vector.broadcast %26 : vector<2x1x32xf32> to vector<2x6x32xf32>
    %28 = arith.select %25, %27, %19 : vector<2x6x32xi1>, vector<2x6x32xf32>
    %c0_23 = arith.constant 0 : index
    %c0_24 = arith.constant 0 : index
    %c0_25 = arith.constant 0 : index
    %29 = vector.load %arg5[%c0_23, %c0_24, %c0_25] : memref<2x6x32xf32, #tpu.memory_space<vmem>>, vector<2x6x32xf32>
    tpu.vector_store %arg5[%c0_23, %c0_24, %c0_25], %28 {strides = array<i32>} : memref<2x6x32xf32, #tpu.memory_space<vmem>>, vector<2x6x32xf32>,
    %30 = vector.shape_cast %1 : vector<6x32xf32> to vector<1x6x32xf32>
    %31 = vector.broadcast %30 : vector<1x6x32xf32> to vector<2x6x32xf32>
    %32 = arith.addf %28, %31 : vector<2x6x32xf32>
    %33 = vector.shape_cast %32 : vector<2x6x32xf32> to vector<12x32xf32>
    %c0_i32 = arith.constant 0 : i32
    %34 = arith.addi %c0_i32, %0 : i32
    %35 = arith.index_cast %34 : i32 to index
    %c0_26 = arith.constant 0 : index
    %36 = vector.load %arg0[%35, %c0_26] : memref<216x128xf32, #tpu.memory_space<vmem>>, vector<1x128xf32>
    %37 = vector.extract_strided_slice %36 {offsets = [0, 0], sizes = [1, 32], strides = [1, 1]} : vector<1x128xf32> to vector<1x32xf32>
    %38 = vector.broadcast %37 : vector<1x32xf32> to vector<2x32xf32>
    %39 = arith.addf %18, %38 : vector<2x32xf32>
    %cst = arith.constant dense<0.000000e+00> : vector<12xf32>
    %40 = vector.multi_reduction <add>, %33, %cst [1] : vector<12x32xf32> to vector<12xf32>
    %41 = vector.shape_cast %40 : vector<12xf32> to vector<12x1xf32>
    %cst_27 = arith.constant 3.200000e+01 : f32
    %42 = vector.broadcast %cst_27 : f32 to vector<12x1xf32>
    %43 = arith.divf %41, %42 : vector<12x1xf32>
    %44 = vector.broadcast %43 : vector<12x1xf32> to vector<12x32xf32>
    %45 = arith.subf %33, %44 : vector<12x32xf32>
    %46 = arith.mulf %45, %45 : vector<12x32xf32>
    %cst_28 = arith.constant dense<0.000000e+00> : vector<12xf32>
    %47 = vector.multi_reduction <add>, %46, %cst_28 [1] : vector<12x32xf32> to vector<12xf32>
    %48 = vector.shape_cast %47 : vector<12xf32> to vector<12x1xf32>
    %cst_29 = arith.constant 3.200000e+01 : f32
    %49 = vector.broadcast %cst_29 : f32 to vector<12x1xf32>
    %50 = arith.divf %48, %49 : vector<12x1xf32>
    %51 = vector.broadcast %43 : vector<12x1xf32> to vector<12x32xf32>
    %52 = arith.subf %33, %51 : vector<12x32xf32>
    %cst_30 = arith.constant 9.99999974E-6 : f32
    %53 = vector.broadcast %cst_30 : f32 to vector<12x1xf32>
    %54 = arith.addf %50, %53 : vector<12x1xf32>
    %55 = math.rsqrt %54 : vector<12x1xf32>
    %56 = vector.broadcast %55 : vector<12x1xf32> to vector<12x32xf32>
    %57 = arith.mulf %52, %56 : vector<12x32xf32>
    %58 = vector.broadcast %7 : vector<1x32xf32> to vector<12x32xf32>
    %59 = arith.mulf %57, %58 : vector<12x32xf32>
    %60 = vector.broadcast %8 : vector<1x32xf32> to vector<12x32xf32>
    %61 = arith.addf %59, %60 : vector<12x32xf32>
    %cst_31 = arith.constant dense<0.000000e+00> : vector<12x64xf32>
    %62 = tpu.matmul %61, %3, %cst_31 {dimension_numbers = #tpu.dot_dimension_numbers<[1], [0], [0], [1], [0, 0, 1, 1], [], []>} : vector<12x32xf32>, vector<32x64xf32>, vector<12x64xf32> -> vector<12x64xf32>
    %63 = vector.broadcast %14 : vector<1x64xf32> to vector<12x64xf32>
    %64 = arith.addf %62, %63 : vector<12x64xf32>
    %65 = vector.extract_strided_slice %64 {offsets = [0, 0], sizes = [12, 32], strides = [1, 1]} : vector<12x64xf32> to vector<12x32xf32>
    %66 = vector.extract_strided_slice %64 {offsets = [0, 32], sizes = [12, 32], strides = [1, 1]} : vector<12x64xf32> to vector<12x32xf32>
    %cst_32 = arith.constant dense<0.000000e+00> : vector<2xf32>
    %67 = vector.multi_reduction <add>, %39, %cst_32 [1] : vector<2x32xf32> to vector<2xf32>
    %68 = vector.shape_cast %67 : vector<2xf32> to vector<2x1xf32>
    %cst_33 = arith.constant 3.200000e+01 : f32
    %69 = vector.broadcast %cst_33 : f32 to vector<2x1xf32>
    %70 = arith.divf %68, %69 : vector<2x1xf32>
    %71 = vector.broadcast %70 : vector<2x1xf32> to vector<2x32xf32>
    %72 = arith.subf %39, %71 : vector<2x32xf32>
    %73 = arith.mulf %72, %72 : vector<2x32xf32>
    %cst_34 = arith.constant dense<0.000000e+00> : vector<2xf32>
    %74 = vector.multi_reduction <add>, %73, %cst_34 [1] : vector<2x32xf32> to vector<2xf32>
    %75 = vector.shape_cast %74 : vector<2xf32> to vector<2x1xf32>
    %cst_35 = arith.constant 3.200000e+01 : f32
    %76 = vector.broadcast %cst_35 : f32 to vector<2x1xf32>
    %77 = arith.divf %75, %76 : vector<2x1xf32>
    %78 = vector.broadcast %70 : vector<2x1xf32> to vector<2x32xf32>
    %79 = arith.subf %39, %78 : vector<2x32xf32>
    %cst_36 = arith.constant 9.99999974E-6 : f32
    %80 = vector.broadcast %cst_36 : f32 to vector<2x1xf32>
    %81 = arith.addf %77, %80 : vector<2x1xf32>
    %82 = math.rsqrt %81 : vector<2x1xf32>
    %83 = vector.broadcast %82 : vector<2x1xf32> to vector<2x32xf32>
    %84 = arith.mulf %79, %83 : vector<2x32xf32>
    %85 = vector.broadcast %7 : vector<1x32xf32> to vector<2x32xf32>
    %86 = arith.mulf %84, %85 : vector<2x32xf32>
    %87 = vector.broadcast %8 : vector<1x32xf32> to vector<2x32xf32>
    %88 = arith.addf %86, %87 : vector<2x32xf32>
    %cst_37 = arith.constant dense<0.000000e+00> : vector<2x32xf32>
    %89 = tpu.matmul %88, %2, %cst_37 {dimension_numbers = #tpu.dot_dimension_numbers<[1], [0], [0], [1], [0, 0, 1, 1], [], []>} : vector<2x32xf32>, vector<32x32xf32>, vector<2x32xf32> -> vector<2x32xf32>
    %90 = vector.broadcast %13 : vector<1x32xf32> to vector<2x32xf32>
    %91 = arith.addf %89, %90 : vector<2x32xf32>
    %cst_38 = arith.constant 0.176776692 : f32
    %92 = vector.broadcast %cst_38 : f32 to vector<2x32xf32>
    %93 = arith.mulf %91, %92 : vector<2x32xf32>
    %94 = tpu.iota {dimensions = array<i32: 1>} : vector<2x12xi32>
    %95 = tpu.iota {dimensions = array<i32: 0>} : vector<2x12xi32>
    %c6_i32 = arith.constant 6 : i32
    %96 = vector.broadcast %c6_i32 : i32 to vector<2x12xi32>
    %97 = arith.muli %95, %96 : vector<2x12xi32>
    %98 = arith.cmpi sge, %94, %97 : vector<2x12xi32>
    %99 = vector.broadcast %0 : i32 to vector<2x12xi32>
    %100 = arith.addi %97, %99 : vector<2x12xi32>
    %101 = arith.cmpi sle, %94, %100 : vector<2x12xi32>
    %102 = arith.andi %98, %101 : vector<2x12xi1>
    %cst_39 = arith.constant dense<0.000000e+00> : vector<2x12xf32>
    %103 = tpu.matmul %93, %65, %cst_39 {dimension_numbers = #tpu.dot_dimension_numbers<[1], [1], [0], [0], [0, 0, 1, 0], [], []>} : vector<2x32xf32>, vector<12x32xf32>, vector<2x12xf32> -> vector<2x12xf32>
    %cst_40 = arith.constant -1.000000e+30 : f32
    %104 = vector.broadcast %cst_40 : f32 to vector<2x12xf32>
    %105 = arith.select %102, %103, %104 : vector<2x12xi1>, vector<2x12xf32>
    %cst_41 = arith.constant dense<0xFF800000> : vector<2xf32>
    %106 = vector.multi_reduction <maximumf>, %105, %cst_41 [1] : vector<2x12xf32> to vector<2xf32>
    %107 = vector.shape_cast %106 : vector<2xf32> to vector<2x1xf32>
    %108 = vector.broadcast %107 : vector<2x1xf32> to vector<2x12xf32>
    %109 = arith.subf %105, %108 : vector<2x12xf32>
    %110 = math.exp %109 : vector<2x12xf32>
    %cst_42 = arith.constant dense<0.000000e+00> : vector<2xf32>
    %111 = vector.multi_reduction <add>, %110, %cst_42 [1] : vector<2x12xf32> to vector<2xf32>
    %112 = vector.shape_cast %111 : vector<2xf32> to vector<2x1xf32>
    %113 = tpu.reciprocal %112 {approx = true} : vector<2x1xf32> -> vector<2x1xf32>
    %114 = vector.broadcast %113 : vector<2x1xf32> to vector<2x12xf32>
    %115 = arith.mulf %110, %114 : vector<2x12xf32>
    %cst_43 = arith.constant dense<0.000000e+00> : vector<2x32xf32>
    %116 = tpu.matmul %115, %66, %cst_43 {dimension_numbers = #tpu.dot_dimension_numbers<[1], [0], [0], [1], [0, 0, 1, 1], [], []>} : vector<2x12xf32>, vector<12x32xf32>, vector<2x32xf32> -> vector<2x32xf32>
    %cst_44 = arith.constant dense<0.000000e+00> : vector<2x32xf32>
    %117 = tpu.matmul %116, %4, %cst_44 {dimension_numbers = #tpu.dot_dimension_numbers<[1], [0], [0], [1], [0, 0, 1, 1], [], []>} : vector<2x32xf32>, vector<32x32xf32>, vector<2x32xf32> -> vector<2x32xf32>
    %118 = arith.addf %39, %117 : vector<2x32xf32>
    %119 = vector.broadcast %15 : vector<1x32xf32> to vector<2x32xf32>
    %120 = arith.addf %118, %119 : vector<2x32xf32>
    %cst_45 = arith.constant dense<0.000000e+00> : vector<2xf32>
    %121 = vector.multi_reduction <add>, %120, %cst_45 [1] : vector<2x32xf32> to vector<2xf32>
    %122 = vector.shape_cast %121 : vector<2xf32> to vector<2x1xf32>
    %cst_46 = arith.constant 3.200000e+01 : f32
    %123 = vector.broadcast %cst_46 : f32 to vector<2x1xf32>
    %124 = arith.divf %122, %123 : vector<2x1xf32>
    %125 = vector.broadcast %124 : vector<2x1xf32> to vector<2x32xf32>
    %126 = arith.subf %120, %125 : vector<2x32xf32>
    %127 = arith.mulf %126, %126 : vector<2x32xf32>
    %cst_47 = arith.constant dense<0.000000e+00> : vector<2xf32>
    %128 = vector.multi_reduction <add>, %127, %cst_47 [1] : vector<2x32xf32> to vector<2xf32>
    %129 = vector.shape_cast %128 : vector<2xf32> to vector<2x1xf32>
    %cst_48 = arith.constant 3.200000e+01 : f32
    %130 = vector.broadcast %cst_48 : f32 to vector<2x1xf32>
    %131 = arith.divf %129, %130 : vector<2x1xf32>
    %132 = vector.broadcast %124 : vector<2x1xf32> to vector<2x32xf32>
    %133 = arith.subf %120, %132 : vector<2x32xf32>
    %cst_49 = arith.constant 9.99999974E-6 : f32
    %134 = vector.broadcast %cst_49 : f32 to vector<2x1xf32>
    %135 = arith.addf %131, %134 : vector<2x1xf32>
    %136 = math.rsqrt %135 : vector<2x1xf32>
    %137 = vector.broadcast %136 : vector<2x1xf32> to vector<2x32xf32>
    %138 = arith.mulf %133, %137 : vector<2x32xf32>
    %139 = vector.broadcast %9 : vector<1x32xf32> to vector<2x32xf32>
    %140 = arith.mulf %138, %139 : vector<2x32xf32>
    %141 = vector.broadcast %10 : vector<1x32xf32> to vector<2x32xf32>
    %142 = arith.addf %140, %141 : vector<2x32xf32>
    %cst_50 = arith.constant dense<0.000000e+00> : vector<2x64xf32>
    %143 = tpu.matmul %142, %5, %cst_50 {dimension_numbers = #tpu.dot_dimension_numbers<[1], [0], [0], [1], [0, 0, 1, 1], [], []>} : vector<2x32xf32>, vector<32x64xf32>, vector<2x64xf32> -> vector<2x64xf32>
    %144 = vector.broadcast %16 : vector<1x64xf32> to vector<2x64xf32>
    %145 = arith.addf %143, %144 : vector<2x64xf32>
    %cst_51 = arith.constant 5.000000e-01 : f32
    %146 = vector.broadcast %cst_51 : f32 to vector<2x64xf32>
    %147 = arith.mulf %146, %145 : vector<2x64xf32>
    %cst_52 = arith.constant 4.471500e-02 : f32
    %148 = vector.broadcast %cst_52 : f32 to vector<2x64xf32>
    %149 = arith.mulf %148, %145 : vector<2x64xf32>
    %150 = arith.mulf %149, %145 : vector<2x64xf32>
    %151 = arith.mulf %150, %145 : vector<2x64xf32>
    %152 = arith.addf %145, %151 : vector<2x64xf32>
    %cst_53 = arith.constant 0.797884583 : f32
    %153 = vector.broadcast %cst_53 : f32 to vector<2x64xf32>
    %154 = arith.mulf %153, %152 : vector<2x64xf32>
    %155 = math.tanh %154 : vector<2x64xf32>
    %cst_54 = arith.constant 1.000000e+00 : f32
    %156 = vector.broadcast %cst_54 : f32 to vector<2x64xf32>
    %157 = arith.addf %156, %155 : vector<2x64xf32>
    %158 = arith.mulf %147, %157 : vector<2x64xf32>
    %cst_55 = arith.constant dense<0.000000e+00> : vector<2x32xf32>
    %159 = tpu.matmul %158, %6, %cst_55 {dimension_numbers = #tpu.dot_dimension_numbers<[1], [0], [0], [1], [0, 0, 1, 1], [], []>} : vector<2x64xf32>, vector<64x32xf32>, vector<2x32xf32> -> vector<2x32xf32>
    %160 = arith.addf %120, %159 : vector<2x32xf32>
    %161 = vector.broadcast %17 : vector<1x32xf32> to vector<2x32xf32>
    %162 = arith.addf %160, %161 : vector<2x32xf32>
    %cst_56 = arith.constant dense<0.000000e+00> : vector<2xf32>
    %163 = vector.multi_reduction <add>, %162, %cst_56 [1] : vector<2x32xf32> to vector<2xf32>
    %164 = vector.shape_cast %163 : vector<2xf32> to vector<2x1xf32>
    %cst_57 = arith.constant 3.200000e+01 : f32
    %165 = vector.broadcast %cst_57 : f32 to vector<2x1xf32>
    %166 = arith.divf %164, %165 : vector<2x1xf32>
    %167 = vector.broadcast %166 : vector<2x1xf32> to vector<2x32xf32>
    %168 = arith.subf %162, %167 : vector<2x32xf32>
    %169 = arith.mulf %168, %168 : vector<2x32xf32>
    %cst_58 = arith.constant dense<0.000000e+00> : vector<2xf32>
    %170 = vector.multi_reduction <add>, %169, %cst_58 [1] : vector<2x32xf32> to vector<2xf32>
    %171 = vector.shape_cast %170 : vector<2xf32> to vector<2x1xf32>
    %cst_59 = arith.constant 3.200000e+01 : f32
    %172 = vector.broadcast %cst_59 : f32 to vector<2x1xf32>
    %173 = arith.divf %171, %172 : vector<2x1xf32>
    %174 = vector.broadcast %166 : vector<2x1xf32> to vector<2x32xf32>
    %175 = arith.subf %162, %174 : vector<2x32xf32>
    %cst_60 = arith.constant 9.99999974E-6 : f32
    %176 = vector.broadcast %cst_60 : f32 to vector<2x1xf32>
    %177 = arith.addf %173, %176 : vector<2x1xf32>
    %178 = math.rsqrt %177 : vector<2x1xf32>
    %179 = vector.broadcast %178 : vector<2x1xf32> to vector<2x32xf32>
    %180 = arith.mulf %175, %179 : vector<2x32xf32>
    %181 = vector.broadcast %11 : vector<1x32xf32> to vector<2x32xf32>
    %182 = arith.mulf %180, %181 : vector<2x32xf32>
    %183 = vector.broadcast %12 : vector<1x32xf32> to vector<2x32xf32>
    %184 = arith.addf %182, %183 : vector<2x32xf32>
    %c0_61 = arith.constant 0 : index
    %c0_62 = arith.constant 0 : index
    %185 = vector.load %arg4[%c0_61, %c0_62] : memref<2x32xf32, #tpu.memory_space<vmem>>, vector<2x32xf32>
    tpu.vector_store %arg4[%c0_61, %c0_62], %184 {strides = array<i32>} : memref<2x32xf32, #tpu.memory_space<vmem>>, vector<2x32xf32>,
    return
  }
}

</mosaic_0001>

<llo_original>
// kernel: step.1
$region0: #{step.1}
  #allocation0 [shape = 'u32[]', space=smem, size = 0x4, offset = 0x4, fixed_abs, tag = 'smem constant byte address 0x4 - core index']
  #allocation1 [shape = 'u32[144,128]{1,0:T(1,128)}', space=vmem, size = 0x12000, scoped, tag = 'internal scratch']
  #allocation2 [shape = 's32[1]{0:T(128)S(6)}', space=smem, size = 0x200, scoped, tag = 'scoped memory for step.1']
  %s0 = inlined_call_operand.hbm [shape: f32[216,128], index: 0, kind: input, shape index: {}]
  %s1 = inlined_call_operand.vmem [shape: f32[2,32], index: 1, kind: input, shape index: {}]
  %s2 = inlined_call_operand.vmem [shape: f32[2,6,32], index: 2, kind: input, shape index: {}, may-alias: {2,5}]
  %s3 = inlined_call_operand.<no memory space> [shape: s32[1], index: 3, kind: input, shape index: {}]
  %s4 = inlined_call_operand.hbm [shape: f32[2,32], index: 4, kind: output, shape index: {0}]
  %s5 = inlined_call_operand.vmem [shape: f32[2,6,32], index: 5, kind: output, shape index: {1}, may-alias: {2,5}]
  %6 = xla_tuple %s4, %s5
  %s7 = sld [smem:[#allocation0]]
  $region38: #{step.1} parent=0
    _
  %s9 = ssub.s32 1, %s7
  %s10 = scalar_select 0, %s9, %s7
  %11 = sst [smem:[#allocation2]] %s3
  $region1: #{step.1} parent=0
    #allocation3 [shape = 'u8[110592]{0}', space=vmem, size = 0x1b000, scoped, tag = 'input window, operand 0, single buffered']
    #allocation4 [shape = 's32[1]{0}', space=sflag, size = 0x4, scoped, tag = 'scoped memory for step.1']
    #allocation5 [shape = 's32[1]{0}', space=sflag, size = 0x4, scoped, tag = 'scoped memory for step.1']
    #allocation6 [shape = 'u8[1024]{0}', space=vmem, size = 0x400, scoped, tag = 'output window, operand 0, single buffered']
    %12 = vsyncpa [#allocation4], 0
    %13 = vsyncpa [#allocation5], 0
    // Predicated region
    $region2: #{step.1} parent=1 // pred_check
      _
    $region3: #{step.1} parent=1 // pred_check_branch
      %15 = sbr.rel (0) target = $region5
    $region4: #{step.1} parent=1 // pred_region
      %s17 = ssub.s32 3456, 3456
      %18 = vsyncadd [#allocation4], %s17
      %s19 = sshll.u32 [#allocation3], 4
      %s20 = int_to_ptr.vmem [resolvable:$true] %s19
      %25 = dma.hbm_to_vmem [thread:$0]  %s0, 3456, %s20, [#allocation4], 128, 128, 8
    $region5: #{step.1} parent=1 // pred_fallthru
      _
    // Predicated region
    $region6: #{step.1} parent=1 // pred_check
      _
    $region7: #{step.1} parent=1 // pred_check_branch
      %27 = sbr.rel (0) target = $region9
    $region8: #{step.1} parent=1 // pred_region
      _
    $region9: #{step.1} parent=1 // pred_fallthru
      _
    // Predicated region
    $region10: #{step.1} parent=1 // pred_check
      _
    $region11: #{step.1} parent=1 // pred_check_branch
      %29 = sbr.rel (0) target = $region13
    $region12: #{step.1} parent=1 // pred_region
      _
    $region13: #{step.1} parent=1 // pred_fallthru
      _
    // Predicated region
    $region14: #{step.1} parent=1 // pred_check
      _
    $region15: #{step.1} parent=1 // pred_check_branch
      %31 = sbr.rel (0) target = $region17
    $region16: #{step.1} parent=1 // pred_region
      _
    $region17: #{step.1} parent=1 // pred_fallthru
      _
    // Predicated region
    $region18: #{step.1} parent=1 // pred_check
      _
    $region19: #{step.1} parent=1 // pred_check_branch
      %33 = sbr.rel (0) target = $region21
    $region20: #{step.1} parent=1 // pred_region
      %34 = dma.done [#allocation4], 3456
    $region21: #{step.1} parent=1 // pred_fallthru
      _
    %s35 = sld [smem:[#allocation2]]
    %v36 = vld [vmem:[#allocation3] sm:$0x3f]
    %v37 = vld [vmem:[#allocation3 + $0x8] sm:$0xff]
    %v38 = vld [vmem:[#allocation3 + $0x10] sm:$0xff]
    %v39 = vld [vmem:[#allocation3 + $0x18] sm:$0xff]
    %v40 = vld [vmem:[#allocation3 + $0x20] sm:$0xff]
    %v41 = vld [vmem:[#allocation3 + $0x28] sm:$0xff]
    %v42 = vld [vmem:[#allocation3 + $0x30] sm:$0xff]
    %v43 = vld [vmem:[#allocation3 + $0x38] sm:$0xff]
    %v44 = vld [vmem:[#allocation3 + $0x40] sm:$0xff]
    %v45 = vld [vmem:[#allocation3 + $0x48] sm:$0xff]
    %v46 = vld [vmem:[#allocation3 + $0x50] sm:$0xff]
    %v47 = vld [vmem:[#allocation3 + $0x58] sm:$0xff]
    %v48 = vld [vmem:[#allocation3 + $0x60] sm:$0xff]
    %v49 = vld [vmem:[#allocation3 + $0x68] sm:$0xff]
    %v50 = vld [vmem:[#allocation3 + $0x70] sm:$0xff]
    %v51 = vld [vmem:[#allocation3 + $0x78] sm:$0xff]
    %v52 = vld [vmem:[#allocation3 + $0x80] sm:$0xff]
    %v53 = vld [vmem:[#allocation3 + $0x88] sm:$0xff]
    %v54 = vld [vmem:[#allocation3 + $0x90] sm:$0xff]
    %v55 = vld [vmem:[#allocation3 + $0x98] sm:$0xff]
    %v56 = vld [vmem:[#allocation3 + $0xa0] sm:$0xff]
    %v57 = vld [vmem:[#allocation3 + $0xa8] sm:$0xff]
    %v58 = vld [vmem:[#allocation3 + $0xb0] sm:$0xff]
    %v59 = vld [vmem:[#allocation3 + $0xb8] sm:$0xff]
    %v60 = vld [vmem:[#allocation3 + $0xc0] sm:$0xff]
    %v61 = vld [vmem:[#allocation3 + $0xc8] sm:$0x1]
    %v62 = vld [vmem:[#allocation3 + $0xc9] sm:$0x1]
    %v63 = vld [vmem:[#allocation3 + $0xca] sm:$0x1]
    %v64 = vld [vmem:[#allocation3 + $0xcb] sm:$0x1]
    %v65 = vld [vmem:[#allocation3 + $0xcc] sm:$0x1]
    %v66 = vld [vmem:[#allocation3 + $0xcd] sm:$0x1]
    %v67 = vld [vmem:[#allocation3 + $0xce] sm:$0x1]
    %v68 = vld [vmem:[#allocation3 + $0xcf] sm:$0x1]
    %v69 = vld [vmem:[#allocation3 + $0xd0] sm:$0x1]
    %v70 = vld [vmem:[#allocation3 + $0xd1] sm:$0x1]
    %v71 = vld [vmem:[#allocation3 + $0xd2] sm:$0x1]
    %v72 = vld [vmem:[%s1] sm:$0x3]
    %v73 = vld [vmem:[%s2] sm:$0x3f]
    %v74 = vld [vmem:[%s2 + $0x8] sm:$0x3f]
    %v75 = vlaneseq
    %v76 = vshrl.u32 %v75, 7
    %v77 = vstv %s35
    %vm78 = vcmp.eq.s32.totalorder %v76, %v77
    %v81 = vunpack.c.l.s4 1966171168
    %v82 = vunpack.c.0.s8 %v81
    %v83 = vlaneseq
    %v84 = vshrl.u32 %v83, 7
    %v85 = vsub.s32 %v82, %v84
    %v86 = vrot.slane %v72, %v85
    %v87 = vcombine.high %v86, %v86
    %v89 = vunpack.c.l.s4 1966171168
    %v90 = vunpack.c.0.s8 %v89
    %v91 = vlaneseq
    %v92 = vshrl.u32 %v91, 7
    %v93 = vsub.s32 %v90, %v92
    %v94 = vrot.slane %v86, %v93
    %v96 = vunpack.c.l.s4 1966171168
    %v97 = vunpack.c.0.s8 %v96
    %v98 = vlaneseq
    %v99 = vshrl.u32 %v98, 7
    %v100 = vsub.s32 %v97, %v99
    %v101 = vrot.slane %v87, %v100
    %v102 = vsel %vm78, 1, 0
    %vm103 = vcmp.eq.s32.totalorder %v102, 1
    %v104 = vlaneseq
    %v105 = vshrl.u32 %v104, 7
    %v106 = vsub.s32 0, %v105
    %v107 = vrot.slane %v94, %v106
    %v108 = vlaneseq
    %v109 = vshrl.u32 %v108, 7
    %v110 = vsub.s32 0, %v109
    %v111 = vrot.slane %v101, %v110
    %v114 = vsel %vm103, %v107, %v73
    %v115 = vsel %vm103, %v111, %v74
    %vm116 = vcmask 259072
    %117 = vst.msk [vmem:[%s5] sm:$0x3f] %vm116, %v114
    %118 = vst.msk [vmem:[%s5 + $0x8] sm:$0x3f] %vm116, %v115
    %v119 = vadd.f32 %v114, %v36
    %v120 = vadd.f32 %v115, %v36
    %v123 = vcombine.high %v119, %v119
    %v125 = vunpack.c.l.s4 1983009808
    %v126 = vunpack.c.0.s8 %v125
    %v127 = vlaneseq
    %v128 = vshrl.u32 %v127, 7
    %v129 = vsub.s32 %v126, %v128
    %v130 = vrot.slane %v119, %v129
    %v132 = vunpack.c.l.s4 1983009808
    %v133 = vunpack.c.0.s8 %v132
    %v134 = vlaneseq
    %v135 = vshrl.u32 %v134, 7
    %v136 = vsub.s32 %v133, %v135
    %v137 = vrot.slane %v123, %v136
    %v138 = vcombine.high %v130, %v130
    %v139 = vcombine.high %v120, %v120
    %v141 = vunpack.c.l.s4 1983009808
    %v142 = vunpack.c.0.s8 %v141
    %v143 = vlaneseq
    %v144 = vshrl.u32 %v143, 7
    %v145 = vsub.s32 %v142, %v144
    %v146 = vrot.slane %v120, %v145
    %v148 = vunpack.c.l.s4 1983009808
    %v149 = vunpack.c.0.s8 %v148
    %v150 = vlaneseq
    %v151 = vshrl.u32 %v150, 7
    %v152 = vsub.s32 %v149, %v151
    %v153 = vrot.slane %v139, %v152
    %v154 = vcombine.high %v146, %v146
    %s161 = scalar_lea.vmem [#allocation3], %s35
    %v162 = vld [vmem:[%s161] sm:$0x1]
    %v163 = vlaneseq
    %v164 = vshrl.u32 %v163, 7
    %v165 = vsub.s32 0, %v164
    %v166 = vrot.slane %v162, %v165
    %v167 = vadd.f32 %v72, %v166
    %v168 = vcombine.low %v130, %v138
    %v169 = vcombine.low %v137, %v146
    %v171 = vunpack.c.l.s4 1983009808
    %v172 = vunpack.c.0.s8 %v171
    %v173 = vlaneseq
    %v174 = vshrl.u32 %v173, 7
    %v175 = vsub.s32 %v172, %v174
    %v176 = vrot.slane %v168, %v175
    %v178 = vunpack.c.l.s4 1983009808
    %v179 = vunpack.c.0.s8 %v178
    %v180 = vlaneseq
    %v181 = vshrl.u32 %v180, 7
    %v182 = vsub.s32 %v179, %v181
    %v183 = vrot.slane %v169, %v182
    %v184 = vcombine.low %v176, %v183
    %v185 = vcombine.low %v154, %v153
    %v187 = vunpack.c.l.s4 1983009808
    %v188 = vunpack.c.0.s8 %v187
    %v189 = vlaneseq
    %v190 = vshrl.u32 %v189, 7
    %v191 = vsub.s32 %v188, %v190
    %v192 = vrot.slane %v185, %v191
    %vm195 = vcmask 261120
    %v196 = vsel %vm195, %v184, 0.0
    %197 = vadd.xlane.f32.xlu0 %v196
    %v198 = vpop.xlane.xlu0 %197
    %vm199 = vcmask 257024
    %v200 = vsel %vm199, %v192, 0.0
    %201 = vadd.xlane.f32.xlu0 %v200
    %v202 = vpop.xlane.xlu0 %201
    %v203 = vrcp.pop 32.0
    %v204 = vmul.f32 %v198, %v203
    %v205 = vmul.f32 %v202, %v203
    %v209 = vunpack.c.l.s4 269488144
    %v210 = vunpack.c.0.s8 %v209
    %v211 = vlaneseq
    %v212 = vshrl.u32 %v211, 7
    %v213 = vsub.s32 %v210, %v212
    %v214 = vrot.slane %v204, %v213
    %v216 = vunpack.c.l.s4 842150450
    %v217 = vunpack.c.0.s8 %v216
    %v218 = vlaneseq
    %v219 = vshrl.u32 %v218, 7
    %v220 = vsub.s32 %v217, %v219
    %v221 = vrot.slane %v204, %v220
    %v223 = vunpack.c.l.s4 1414812756
    %v224 = vunpack.c.0.s8 %v223
    %v225 = vlaneseq
    %v226 = vshrl.u32 %v225, 7
    %v227 = vsub.s32 %v224, %v226
    %v228 = vrot.slane %v204, %v227
    %v230 = vunpack.c.l.s4 1987475062
    %v231 = vunpack.c.0.s8 %v230
    %v232 = vlaneseq
    %v233 = vshrl.u32 %v232, 7
    %v234 = vsub.s32 %v231, %v233
    %v235 = vrot.slane %v204, %v234
    %v237 = vunpack.c.l.s4 269488144
    %v238 = vunpack.c.0.s8 %v237
    %v239 = vlaneseq
    %v240 = vshrl.u32 %v239, 7
    %v241 = vsub.s32 %v238, %v240
    %v242 = vrot.slane %v205, %v241
    %v244 = vunpack.c.l.s4 842150450
    %v245 = vunpack.c.0.s8 %v244
    %v246 = vlaneseq
    %v247 = vshrl.u32 %v246, 7
    %v248 = vsub.s32 %v245, %v247
    %v249 = vrot.slane %v205, %v248
    %v256 = vsub.f32 %v130, %v214
    %v257 = vsub.f32 %v138, %v221
    %v258 = vsub.f32 %v137, %v228
    %v259 = vsub.f32 %v146, %v235
    %v260 = vsub.f32 %v154, %v242
    %v261 = vsub.f32 %v153, %v249
    %v262 = vmul.f32 %v256, %v256
    %v263 = vmul.f32 %v257, %v257
    %v264 = vmul.f32 %v258, %v258
    %v265 = vmul.f32 %v259, %v259
    %v266 = vmul.f32 %v260, %v260
    %v267 = vmul.f32 %v261, %v261
    %v274 = vcombine.low %v262, %v263
    %v275 = vcombine.low %v264, %v265
    %v277 = vunpack.c.l.s4 1983009808
    %v278 = vunpack.c.0.s8 %v277
    %v279 = vlaneseq
    %v280 = vshrl.u32 %v279, 7
    %v281 = vsub.s32 %v278, %v280
    %v282 = vrot.slane %v274, %v281
    %v284 = vunpack.c.l.s4 1983009808
    %v285 = vunpack.c.0.s8 %v284
    %v286 = vlaneseq
    %v287 = vshrl.u32 %v286, 7
    %v288 = vsub.s32 %v285, %v287
    %v289 = vrot.slane %v275, %v288
    %v290 = vcombine.low %v282, %v289
    %v291 = vcombine.low %v266, %v267
    %v293 = vunpack.c.l.s4 1983009808
    %v294 = vunpack.c.0.s8 %v293
    %v295 = vlaneseq
    %v296 = vshrl.u32 %v295, 7
    %v297 = vsub.s32 %v294, %v296
    %v298 = vrot.slane %v291, %v297
    %v301 = vsel %vm195, %v290, 0.0
    %302 = vadd.xlane.f32.xlu0 %v301
    %v303 = vpop.xlane.xlu0 %302
    %v304 = vsel %vm199, %v298, 0.0
    %305 = vadd.xlane.f32.xlu0 %v304
    %v306 = vpop.xlane.xlu0 %305
    %v307 = vmul.f32 %v303, %v203
    %v308 = vmul.f32 %v306, %v203
    %v309 = vadd.f32 %v307, 1e-05
    %v310 = vadd.f32 %v308, 1e-05
    %v311 = vrsqrt.pop %v309
    %v312 = vrsqrt.pop %v310
    %v316 = vunpack.c.l.s4 269488144
    %v317 = vunpack.c.0.s8 %v316
    %v318 = vlaneseq
    %v319 = vshrl.u32 %v318, 7
    %v320 = vsub.s32 %v317, %v319
    %v321 = vrot.slane %v311, %v320
    %v323 = vunpack.c.l.s4 842150450
    %v324 = vunpack.c.0.s8 %v323
    %v325 = vlaneseq
    %v326 = vshrl.u32 %v325, 7
    %v327 = vsub.s32 %v324, %v326
    %v328 = vrot.slane %v311, %v327
    %v330 = vunpack.c.l.s4 1414812756
    %v331 = vunpack.c.0.s8 %v330
    %v332 = vlaneseq
    %v333 = vshrl.u32 %v332, 7
    %v334 = vsub.s32 %v331, %v333
    %v335 = vrot.slane %v311, %v334
    %v337 = vunpack.c.l.s4 1987475062
    %v338 = vunpack.c.0.s8 %v337
    %v339 = vlaneseq
    %v340 = vshrl.u32 %v339, 7
    %v341 = vsub.s32 %v338, %v340
    %v342 = vrot.slane %v311, %v341
    %v344 = vunpack.c.l.s4 269488144
    %v345 = vunpack.c.0.s8 %v344
    %v346 = vlaneseq
    %v347 = vshrl.u32 %v346, 7
    %v348 = vsub.s32 %v345, %v347
    %v349 = vrot.slane %v312, %v348
    %v351 = vunpack.c.l.s4 842150450
    %v352 = vunpack.c.0.s8 %v351
    %v353 = vlaneseq
    %v354 = vshrl.u32 %v353, 7
    %v355 = vsub.s32 %v352, %v354
    %v356 = vrot.slane %v312, %v355
    %v363 = vmul.f32 %v256, %v321
    %v364 = vmul.f32 %v257, %v328
    %v365 = vmul.f32 %v258, %v335
    %v366 = vmul.f32 %v259, %v342
    %v367 = vmul.f32 %v260, %v349
    %v368 = vmul.f32 %v261, %v356
    %v369 = vlaneseq
    %v370 = vshrl.u32 %v369, 7
    %v371 = vsub.s32 0, %v370
    %v372 = vrot.slane %v61, %v371
    %v374 = vcombine.high %v372, %v372
    %v376 = vunpack.c.l.s4 1983009808
    %v377 = vunpack.c.0.s8 %v376
    %v378 = vlaneseq
    %v379 = vshrl.u32 %v378, 7
    %v380 = vsub.s32 %v377, %v379
    %v381 = vrot.slane %v372, %v380
    %v383 = vunpack.c.l.s4 1983009808
    %v384 = vunpack.c.0.s8 %v383
    %v385 = vlaneseq
    %v386 = vshrl.u32 %v385, 7
    %v387 = vsub.s32 %v384, %v386
    %v388 = vrot.slane %v374, %v387
    %v389 = vcombine.high %v381, %v381
    %v390 = vcombine.high %v388, %v388
    %v395 = vmul.f32 %v363, %v381
    %v396 = vmul.f32 %v364, %v389
    %v397 = vmul.f32 %v365, %v388
    %v398 = vmul.f32 %v366, %v390
    %v399 = vmul.f32 %v367, %v381
    %v400 = vmul.f32 %v368, %v389
    %v401 = vlaneseq
    %v402 = vshrl.u32 %v401, 7
    %v403 = vsub.s32 0, %v402
    %v404 = vrot.slane %v62, %v403
    %v406 = vcombine.high %v404, %v404
    %v408 = vunpack.c.l.s4 1983009808
    %v409 = vunpack.c.0.s8 %v408
    %v410 = vlaneseq
    %v411 = vshrl.u32 %v410, 7
    %v412 = vsub.s32 %v409, %v411
    %v413 = vrot.slane %v404, %v412
    %v415 = vunpack.c.l.s4 1983009808
    %v416 = vunpack.c.0.s8 %v415
    %v417 = vlaneseq
    %v418 = vshrl.u32 %v417, 7
    %v419 = vsub.s32 %v416, %v418
    %v420 = vrot.slane %v406, %v419
    %v421 = vcombine.high %v413, %v413
    %v422 = vcombine.high %v420, %v420
    %v427 = vadd.f32 %v395, %v413
    %v428 = vadd.f32 %v396, %v421
    %v429 = vadd.f32 %v397, %v420
    %v430 = vadd.f32 %v398, %v422
    %v431 = vadd.f32 %v399, %v413
    %v432 = vadd.f32 %v400, %v421
    %v433 = vlaneseq
    %v434 = vshrl.u32 %v433, 7
    %v435 = vsub.s32 0, %v434
    %v436 = vrot.slane %v68, %v435
    %v443 = vcombine.low %v427, %v428
    %v444 = vcombine.low %v429, %v430
    %v446 = vunpack.c.l.s4 1983009808
    %v447 = vunpack.c.0.s8 %v446
    %v448 = vlaneseq
    %v449 = vshrl.u32 %v448, 7
    %v450 = vsub.s32 %v447, %v449
    %v451 = vrot.slane %v443, %v450
    %v453 = vunpack.c.l.s4 1983009808
    %v454 = vunpack.c.0.s8 %v453
    %v455 = vlaneseq
    %v456 = vshrl.u32 %v455, 7
    %v457 = vsub.s32 %v454, %v456
    %v458 = vrot.slane %v444, %v457
    %v459 = vcombine.low %v451, %v458
    %v460 = vcombine.low %v431, %v432
    %v462 = vunpack.c.l.s4 1983009808
    %v463 = vunpack.c.0.s8 %v462
    %v464 = vlaneseq
    %v465 = vshrl.u32 %v464, 7
    %v466 = vsub.s32 %v463, %v465
    %v467 = vrot.slane %v460, %v466
    %v468 = vsel %vm195, %v459, 0
    %v470 = vsel %vm195, %v467, 0
    %472 = vmatprep.subr.mxu0 0.0
    %473 = vmatpush1.msra.mxu0 %v41
    %474 = vmatprep.subr.mxu0 0.0
    %475 = vmatpush1.msra.mxu0 %v42
    %476 = vmatprep.subr.mxu0 0.0
    %477 = vmatpush1.msra.mxu0 %v43
    %478 = vmatprep.subr.mxu0 0.0
    %479 = vmatpush1.msra.mxu0 %v44
    %480 = vmatprep.subr.mxu0 0.0
    %481 = vmatpush1.msra.mxu0 0.0
    %482 = vmatprep.subr.mxu0 0.0
    %483 = vmatpush1.msra.mxu0 0.0
    %484 = vmatprep.subr.mxu0 0.0
    %485 = vmatpush1.msra.mxu0 0.0
    %486 = vmatprep.subr.mxu0 0.0
    %487 = vmatpush1.msra.mxu0 0.0
    %488 = vmatprep.subr.mxu0 0.0
    %489 = vmatpush1.msra.mxu0 0.0
    %490 = vmatprep.subr.mxu0 0.0
    %491 = vmatpush1.msra.mxu0 0.0
    %492 = vmatprep.subr.mxu0 0.0
    %493 = vmatpush1.msra.mxu0 0.0
    %494 = vmatprep.subr.mxu0 0.0
    %495 = vmatpush1.msra.mxu0 0.0
    %496 = vmatprep.subr.mxu0 0.0
    %497 = vmatpush1.msra.mxu0 0.0
    %498 = vmatprep.subr.mxu0 0.0
    %499 = vmatpush1.msra.mxu0 0.0
    %500 = vmatprep.subr.mxu0 0.0
    %501 = vmatpush1.msra.mxu0 0.0
    %502 = vmatprep.subr.mxu0 0.0
    %503 = vmatpush1.msra.mxu0 0.0
    %504 = vmatprep.subr.mxu0 0.0
    %505 = vmatpush1.msra.mxu0 0.0
    %506 = vmatprep.subr.mxu0 0.0
    %507 = vmatpush1.msra.mxu0 0.0
    %508 = vmatprep.subr.mxu0 0.0
    %509 = vmatpush1.msra.mxu0 0.0
    %510 = vmatprep.subr.mxu0 0.0
    %511 = vmatpush1.msra.mxu0 0.0
    %512 = vmatprep.subr.mxu0 0.0
    %513 = vmatpush1.msra.mxu0 0.0
    %514 = vmatprep.subr.mxu0 0.0
    %515 = vmatpush1.msra.mxu0 0.0
    %516 = vmatprep.subr.mxu0 0.0
    %517 = vmatpush1.msra.mxu0 0.0
    %518 = vmatprep.subr.mxu0 0.0
    %519 = vmatpush1.msra.mxu0 0.0
    %520 = vmatprep.subr.mxu0 0.0
    %521 = vmatpush1.msra.mxu0 0.0
    %522 = vmatprep.subr.mxu0 0.0
    %523 = vmatpush1.msra.mxu0 0.0
    %524 = vmatprep.subr.mxu0 0.0
    %525 = vmatpush1.msra.mxu0 0.0
    %526 = vmatprep.subr.mxu0 0.0
    %527 = vmatpush1.msra.mxu0 0.0
    %528 = vmatprep.subr.mxu0 0.0
    %529 = vmatpush1.msra.mxu0 0.0
    %530 = vmatprep.subr.mxu0 0.0
    %531 = vmatpush1.msra.mxu0 0.0
    %532 = vmatprep.subr.mxu0 0.0
    %533 = vmatpush1.msra.mxu0 0.0
    %534 = vmatprep.subr.mxu0 0.0
    %535 = vmatpush1.msra.mxu0 0.0
    %536 = vmatprep.mubr.f32.mxu0 0.0
    %537 = vmatmul.mubr.f32.gmra.mrb[0].mxu0 %v468
    %v538 = vpop.f32.mrb[0].mxu0
    %v539 = vadd.f32 %v436, %v538
    %v540 = vpop.f32.mrb[0].mxu0
    %541 = vmatprep.mubr.f32.mxu0 0.0
    %542 = vmatmul.mubr.f32.gmra.mrb[0].mxu0 %v470
    %v543 = vpop.f32.mrb[0].mxu0
    %v544 = vadd.f32 %v436, %v543
    %v545 = vpop.f32.mrb[0].mxu0
    %546 = vdwg.mxu0
    %vm547 = vcmask 254976
    %v548 = vsel %vm547, %v167, 0.0
    %549 = vadd.xlane.f32.xlu0 %v548
    %v550 = vpop.xlane.xlu0 %549
    %v551 = vmul.f32 %v550, %v203
    %v552 = vsub.f32 %v167, %v551
    %v553 = vmul.f32 %v552, %v552
    %v554 = vsel %vm547, %v553, 0.0
    %555 = vadd.xlane.f32.xlu0 %v554
    %v556 = vpop.xlane.xlu0 %555
    %v557 = vmul.f32 %v556, %v203
    %v558 = vadd.f32 %v557, 1e-05
    %v559 = vrsqrt.pop %v558
    %v560 = vmul.f32 %v552, %v559
    %v561 = vmul.f32 %v560, %v372
    %v562 = vadd.f32 %v561, %v404
    %v563 = vlaneseq
    %v564 = vshrl.u32 %v563, 7
    %v565 = vsub.s32 0, %v564
    %v566 = vrot.slane %v67, %v565
    %v568 = vsel %vm195, %v562, 0
    %570 = vmatprep.subr.mxu0 0.0
    %571 = vmatpush1.msra.mxu0 %v37
    %572 = vmatprep.subr.mxu0 0.0
    %573 = vmatpush1.msra.mxu0 %v38
    %574 = vmatprep.subr.mxu0 0.0
    %575 = vmatpush1.msra.mxu0 %v39
    %576 = vmatprep.subr.mxu0 0.0
    %577 = vmatpush1.msra.mxu0 %v40
    %578 = vmatprep.subr.mxu0 0.0
    %579 = vmatpush1.msra.mxu0 0.0
    %580 = vmatprep.subr.mxu0 0.0
    %581 = vmatpush1.msra.mxu0 0.0
    %582 = vmatprep.subr.mxu0 0.0
    %583 = vmatpush1.msra.mxu0 0.0
    %584 = vmatprep.subr.mxu0 0.0
    %585 = vmatpush1.msra.mxu0 0.0
    %586 = vmatprep.subr.mxu0 0.0
    %587 = vmatpush1.msra.mxu0 0.0
    %588 = vmatprep.subr.mxu0 0.0
    %589 = vmatpush1.msra.mxu0 0.0
    %590 = vmatprep.subr.mxu0 0.0
    %591 = vmatpush1.msra.mxu0 0.0
    %592 = vmatprep.subr.mxu0 0.0
    %593 = vmatpush1.msra.mxu0 0.0
    %594 = vmatprep.subr.mxu0 0.0
    %595 = vmatpush1.msra.mxu0 0.0
    %596 = vmatprep.subr.mxu0 0.0
    %597 = vmatpush1.msra.mxu0 0.0
    %598 = vmatprep.subr.mxu0 0.0
    %599 = vmatpush1.msra.mxu0 0.0
    %600 = vmatprep.subr.mxu0 0.0
    %601 = vmatpush1.msra.mxu0 0.0
    %602 = vmatprep.subr.mxu0 0.0
    %603 = vmatpush1.msra.mxu0 0.0
    %604 = vmatprep.subr.mxu0 0.0
    %605 = vmatpush1.msra.mxu0 0.0
    %606 = vmatprep.subr.mxu0 0.0
    %607 = vmatpush1.msra.mxu0 0.0
    %608 = vmatprep.subr.mxu0 0.0
    %609 = vmatpush1.msra.mxu0 0.0
    %610 = vmatprep.subr.mxu0 0.0
    %611 = vmatpush1.msra.mxu0 0.0
    %612 = vmatprep.subr.mxu0 0.0
    %613 = vmatpush1.msra.mxu0 0.0
    %614 = vmatprep.subr.mxu0 0.0
    %615 = vmatpush1.msra.mxu0 0.0
    %616 = vmatprep.subr.mxu0 0.0
    %617 = vmatpush1.msra.mxu0 0.0
    %618 = vmatprep.subr.mxu0 0.0
    %619 = vmatpush1.msra.mxu0 0.0
    %620 = vmatprep.subr.mxu0 0.0
    %621 = vmatpush1.msra.mxu0 0.0
    %622 = vmatprep.subr.mxu0 0.0
    %623 = vmatpush1.msra.mxu0 0.0
    %624 = vmatprep.subr.mxu0 0.0
    %625 = vmatpush1.msra.mxu0 0.0
    %626 = vmatprep.subr.mxu0 0.0
    %627 = vmatpush1.msra.mxu0 0.0
    %628 = vmatprep.subr.mxu0 0.0
    %629 = vmatpush1.msra.mxu0 0.0
    %630 = vmatprep.subr.mxu0 0.0
    %631 = vmatpush1.msra.mxu0 0.0
    %632 = vmatprep.subr.mxu0 0.0
    %633 = vmatpush1.msra.mxu0 0.0
    %634 = vmatprep.mubr.f32.mxu0 0.0
    %635 = vmatmul.mubr.f32.gmra.mrb[0].mxu0 %v568
    %v636 = vpop.f32.mrb[0].mxu0
    %v637 = vadd.f32 %v566, %v636
    %v638 = vpop.f32.mrb[0].mxu0
    %639 = vdwg.mxu0
    %v640 = vmul.f32 %v637, 0.17677669
    %v641 = vlaneseq
    %v642 = vand.u32 %v641, 127
    %v643 = vmul.u32 %v76, 6
    %vm644 = vcmp.ge.s32.totalorder %v642, %v643
    %v645 = vadd.s32 %v643, %v77
    %vm646 = vcmp.le.s32.totalorder %v642, %v645
    %vm647 = vmand %vm644, %vm646
    %v649 = vsel %vm195, %v640, 0
    %v652 = vsel %vm195, %v539, 0
    %v655 = vsel %vm195, %v544, 0
    %657 = vmatprep.subr.mxu0 0.0
    %658 = vmatpush1.xpose.msra.mxu0 %v652
    %659 = vmatprep.subr.mxu0 0.0
    %660 = vmatpush1.xpose.msra.mxu0 %v655
    %661 = vmatprep.subr.mxu0 0.0
    %662 = vmatpush1.xpose.msra.mxu0 0.0
    %663 = vmatprep.subr.mxu0 0.0
    %664 = vmatpush1.xpose.msra.mxu0 0.0
    %665 = vmatprep.subr.mxu0 0.0
    %666 = vmatpush1.xpose.msra.mxu0 0.0
    %667 = vmatprep.subr.mxu0 0.0
    %668 = vmatpush1.xpose.msra.mxu0 0.0
    %669 = vmatprep.subr.mxu0 0.0
    %670 = vmatpush1.xpose.msra.mxu0 0.0
    %671 = vmatprep.subr.mxu0 0.0
    %672 = vmatpush1.xpose.msra.mxu0 0.0
    %673 = vmatprep.subr.mxu0 0.0
    %674 = vmatpush1.xpose.msra.mxu0 0.0
    %675 = vmatprep.subr.mxu0 0.0
    %676 = vmatpush1.xpose.msra.mxu0 0.0
    %677 = vmatprep.subr.mxu0 0.0
    %678 = vmatpush1.xpose.msra.mxu0 0.0
    %679 = vmatprep.subr.mxu0 0.0
    %680 = vmatpush1.xpose.msra.mxu0 0.0
    %681 = vmatprep.subr.mxu0 0.0
    %682 = vmatpush1.xpose.msra.mxu0 0.0
    %683 = vmatprep.subr.mxu0 0.0
    %684 = vmatpush1.xpose.msra.mxu0 0.0
    %685 = vmatprep.subr.mxu0 0.0
    %686 = vmatpush1.xpose.msra.mxu0 0.0
    %687 = vmatprep.subr.mxu0 0.0
    %688 = vmatpush1.xpose.msra.mxu0 0.0
    %689 = vmatprep.subr.mxu0 0.0
    %690 = vmatpush1.xpose.msra.mxu0 0.0
    %691 = vmatprep.subr.mxu0 0.0
    %692 = vmatpush1.xpose.msra.mxu0 0.0
    %693 = vmatprep.subr.mxu0 0.0
    %694 = vmatpush1.xpose.msra.mxu0 0.0
    %695 = vmatprep.subr.mxu0 0.0
    %696 = vmatpush1.xpose.msra.mxu0 0.0
    %697 = vmatprep.subr.mxu0 0.0
    %698 = vmatpush1.xpose.msra.mxu0 0.0
    %699 = vmatprep.subr.mxu0 0.0
    %700 = vmatpush1.xpose.msra.mxu0 0.0
    %701 = vmatprep.subr.mxu0 0.0
    %702 = vmatpush1.xpose.msra.mxu0 0.0
    %703 = vmatprep.subr.mxu0 0.0
    %704 = vmatpush1.xpose.msra.mxu0 0.0
    %705 = vmatprep.subr.mxu0 0.0
    %706 = vmatpush1.xpose.msra.mxu0 0.0
    %707 = vmatprep.subr.mxu0 0.0
    %708 = vmatpush1.xpose.msra.mxu0 0.0
    %709 = vmatprep.subr.mxu0 0.0
    %710 = vmatpush1.xpose.msra.mxu0 0.0
    %711 = vmatprep.subr.mxu0 0.0
    %712 = vmatpush1.xpose.msra.mxu0 0.0
    %713 = vmatprep.subr.mxu0 0.0
    %714 = vmatpush1.xpose.msra.mxu0 0.0
    %715 = vmatprep.subr.mxu0 0.0
    %716 = vmatpush1.xpose.msra.mxu0 0.0
    %717 = vmatprep.subr.mxu0 0.0
    %718 = vmatpush1.xpose.msra.mxu0 0.0
    %719 = vmatprep.subr.mxu0 0.0
    %720 = vmatpush1.xpose.msra.mxu0 0.0
    %721 = vmatprep.mubr.f32.mxu0 0.0
    %722 = vmatmul.mubr.f32.gmra.mrb[0].mxu0 %v649
    %v723 = vpop.f32.mrb[0].mxu0
    %v724 = vadd.f32 0.0, %v723
    %v725 = vpop.f32.mrb[0].mxu0
    %726 = vdwg.mxu0
    %v727 = vsel %vm647, %v724, -1e+30
    %vm728 = vcmask 91136
    %v729 = vsel %vm728, %v727, -inf
    %730 = vmax.xlane.f32.xlu0 %v729
    %v731 = vpop.xlane.xlu0 %730
    %v732 = vsub.f32 %v727, %v731
    %v733 = vmul.f32 %v732, 1.442695
    %v734 = vpow.pop %v733
    %v735 = vsel %vm728, %v734, 0.0
    %736 = vadd.xlane.f32.xlu0 %v735
    %v737 = vpop.xlane.xlu0 %736
    %v738 = vrcp.pop %v737
    %v739 = vmul.f32 %v734, %v738
    %740 = vrot.lane.b32.xlu0 %v539, 96
    %v741 = vpop.permute.xlu0 %740
    %742 = vrot.lane.b32.xlu0 %v544, 96
    %v743 = vpop.permute.xlu0 %742
    %vm745 = vcmask 97280
    %v747 = vsel %vm745, %v739, 0
    %vm749 = vcmask 1043456
    %v750 = vsel %vm749, %v743, 0
    %752 = vmatprep.subr.mxu0 0.0
    %753 = vmatpush1.msra.mxu0 %v741
    %754 = vmatprep.subr.mxu0 0.0
    %755 = vmatpush1.msra.mxu0 %v750
    %756 = vmatprep.subr.mxu0 0.0
    %757 = vmatpush1.msra.mxu0 0.0
    %758 = vmatprep.subr.mxu0 0.0
    %759 = vmatpush1.msra.mxu0 0.0
    %760 = vmatprep.subr.mxu0 0.0
    %761 = vmatpush1.msra.mxu0 0.0
    %762 = vmatprep.subr.mxu0 0.0
    %763 = vmatpush1.msra.mxu0 0.0
    %764 = vmatprep.subr.mxu0 0.0
    %765 = vmatpush1.msra.mxu0 0.0
    %766 = vmatprep.subr.mxu0 0.0
    %767 = vmatpush1.msra.mxu0 0.0
    %768 = vmatprep.subr.mxu0 0.0
    %769 = vmatpush1.msra.mxu0 0.0
    %770 = vmatprep.subr.mxu0 0.0
    %771 = vmatpush1.msra.mxu0 0.0
    %772 = vmatprep.subr.mxu0 0.0
    %773 = vmatpush1.msra.mxu0 0.0
    %774 = vmatprep.subr.mxu0 0.0
    %775 = vmatpush1.msra.mxu0 0.0
    %776 = vmatprep.subr.mxu0 0.0
    %777 = vmatpush1.msra.mxu0 0.0
    %778 = vmatprep.subr.mxu0 0.0
    %779 = vmatpush1.msra.mxu0 0.0
    %780 = vmatprep.subr.mxu0 0.0
    %781 = vmatpush1.msra.mxu0 0.0
    %782 = vmatprep.subr.mxu0 0.0
    %783 = vmatpush1.msra.mxu0 0.0
    %784 = vmatprep.subr.mxu0 0.0
    %785 = vmatpush1.msra.mxu0 0.0
    %786 = vmatprep.subr.mxu0 0.0
    %787 = vmatpush1.msra.mxu0 0.0
    %788 = vmatprep.subr.mxu0 0.0
    %789 = vmatpush1.msra.mxu0 0.0
    %790 = vmatprep.subr.mxu0 0.0
    %791 = vmatpush1.msra.mxu0 0.0
    %792 = vmatprep.subr.mxu0 0.0
    %793 = vmatpush1.msra.mxu0 0.0
    %794 = vmatprep.subr.mxu0 0.0
    %795 = vmatpush1.msra.mxu0 0.0
    %796 = vmatprep.subr.mxu0 0.0
    %797 = vmatpush1.msra.mxu0 0.0
    %798 = vmatprep.subr.mxu0 0.0
    %799 = vmatpush1.msra.mxu0 0.0
    %800 = vmatprep.subr.mxu0 0.0
    %801 = vmatpush1.msra.mxu0 0.0
    %802 = vmatprep.subr.mxu0 0.0
    %803 = vmatpush1.msra.mxu0 0.0
    %804 = vmatprep.subr.mxu0 0.0
    %805 = vmatpush1.msra.mxu0 0.0
    %806 = vmatprep.subr.mxu0 0.0
    %807 = vmatpush1.msra.mxu0 0.0
    %808 = vmatprep.subr.mxu0 0.0
    %809 = vmatpush1.msra.mxu0 0.0
    %810 = vmatprep.subr.mxu0 0.0
    %811 = vmatpush1.msra.mxu0 0.0
    %812 = vmatprep.subr.mxu0 0.0
    %813 = vmatpush1.msra.mxu0 0.0
    %814 = vmatprep.subr.mxu0 0.0
    %815 = vmatpush1.msra.mxu0 0.0
    %816 = vmatprep.mubr.f32.mxu0 0.0
    %817 = vmatmul.mubr.f32.gmra.mrb[0].mxu0 %v747
    %v818 = vpop.f32.mrb[0].mxu0
    %v819 = vadd.f32 0.0, %v818
    %v820 = vpop.f32.mrb[0].mxu0
    %821 = vdwg.mxu0
    %v823 = vsel %vm195, %v819, 0
    %825 = vmatprep.subr.mxu0 0.0
    %826 = vmatpush1.msra.mxu0 %v45
    %827 = vmatprep.subr.mxu0 0.0
    %828 = vmatpush1.msra.mxu0 %v46
    %829 = vmatprep.subr.mxu0 0.0
    %830 = vmatpush1.msra.mxu0 %v47
    %831 = vmatprep.subr.mxu0 0.0
    %832 = vmatpush1.msra.mxu0 %v48
    %833 = vmatprep.subr.mxu0 0.0
    %834 = vmatpush1.msra.mxu0 0.0
    %835 = vmatprep.subr.mxu0 0.0
    %836 = vmatpush1.msra.mxu0 0.0
    %837 = vmatprep.subr.mxu0 0.0
    %838 = vmatpush1.msra.mxu0 0.0
    %839 = vmatprep.subr.mxu0 0.0
    %840 = vmatpush1.msra.mxu0 0.0
    %841 = vmatprep.subr.mxu0 0.0
    %842 = vmatpush1.msra.mxu0 0.0
    %843 = vmatprep.subr.mxu0 0.0
    %844 = vmatpush1.msra.mxu0 0.0
    %845 = vmatprep.subr.mxu0 0.0
    %846 = vmatpush1.msra.mxu0 0.0
    %847 = vmatprep.subr.mxu0 0.0
    %848 = vmatpush1.msra.mxu0 0.0
    %849 = vmatprep.subr.mxu0 0.0
    %850 = vmatpush1.msra.mxu0 0.0
    %851 = vmatprep.subr.mxu0 0.0
    %852 = vmatpush1.msra.mxu0 0.0
    %853 = vmatprep.subr.mxu0 0.0
    %854 = vmatpush1.msra.mxu0 0.0
    %855 = vmatprep.subr.mxu0 0.0
    %856 = vmatpush1.msra.mxu0 0.0
    %857 = vmatprep.subr.mxu0 0.0
    %858 = vmatpush1.msra.mxu0 0.0
    %859 = vmatprep.subr.mxu0 0.0
    %860 = vmatpush1.msra.mxu0 0.0
    %861 = vmatprep.subr.mxu0 0.0
    %862 = vmatpush1.msra.mxu0 0.0
    %863 = vmatprep.subr.mxu0 0.0
    %864 = vmatpush1.msra.mxu0 0.0
    %865 = vmatprep.subr.mxu0 0.0
    %866 = vmatpush1.msra.mxu0 0.0
    %867 = vmatprep.subr.mxu0 0.0
    %868 = vmatpush1.msra.mxu0 0.0
    %869 = vmatprep.subr.mxu0 0.0
    %870 = vmatpush1.msra.mxu0 0.0
    %871 = vmatprep.subr.mxu0 0.0
    %872 = vmatpush1.msra.mxu0 0.0
    %873 = vmatprep.subr.mxu0 0.0
    %874 = vmatpush1.msra.mxu0 0.0
    %875 = vmatprep.subr.mxu0 0.0
    %876 = vmatpush1.msra.mxu0 0.0
    %877 = vmatprep.subr.mxu0 0.0
    %878 = vmatpush1.msra.mxu0 0.0
    %879 = vmatprep.subr.mxu0 0.0
    %880 = vmatpush1.msra.mxu0 0.0
    %881 = vmatprep.subr.mxu0 0.0
    %882 = vmatpush1.msra.mxu0 0.0
    %883 = vmatprep.subr.mxu0 0.0
    %884 = vmatpush1.msra.mxu0 0.0
    %885 = vmatprep.subr.mxu0 0.0
    %886 = vmatpush1.msra.mxu0 0.0
    %887 = vmatprep.subr.mxu0 0.0
    %888 = vmatpush1.msra.mxu0 0.0
    %889 = vmatprep.mubr.f32.mxu0 0.0
    %890 = vmatmul.mubr.f32.gmra.mrb[0].mxu0 %v823
    %v891 = vpop.f32.mrb[0].mxu0
    %v892 = vadd.f32 0.0, %v891
    %v893 = vpop.f32.mrb[0].mxu0
    %894 = vdwg.mxu0
    %v895 = vadd.f32 %v167, %v892
    %v896 = vlaneseq
    %v897 = vshrl.u32 %v896, 7
    %v898 = vsub.s32 0, %v897
    %v899 = vrot.slane %v69, %v898
    %v900 = vadd.f32 %v895, %v899
    %v901 = vsel %vm547, %v900, 0.0
    %902 = vadd.xlane.f32.xlu0 %v901
    %v903 = vpop.xlane.xlu0 %902
    %v904 = vmul.f32 %v903, %v203
    %v905 = vsub.f32 %v900, %v904
    %v906 = vmul.f32 %v905, %v905
    %v907 = vsel %vm547, %v906, 0.0
    %908 = vadd.xlane.f32.xlu0 %v907
    %v909 = vpop.xlane.xlu0 %908
    %v910 = vmul.f32 %v909, %v203
    %v911 = vadd.f32 %v910, 1e-05
    %v912 = vrsqrt.pop %v911
    %v913 = vmul.f32 %v905, %v912
    %v914 = vlaneseq
    %v915 = vshrl.u32 %v914, 7
    %v916 = vsub.s32 0, %v915
    %v917 = vrot.slane %v63, %v916
    %v918 = vmul.f32 %v913, %v917
    %v919 = vlaneseq
    %v920 = vshrl.u32 %v919, 7
    %v921 = vsub.s32 0, %v920
    %v922 = vrot.slane %v64, %v921
    %v923 = vadd.f32 %v918, %v922
    %v924 = vlaneseq
    %v925 = vshrl.u32 %v924, 7
    %v926 = vsub.s32 0, %v925
    %v927 = vrot.slane %v70, %v926
    %v929 = vsel %vm195, %v923, 0
    %931 = vmatprep.subr.mxu0 0.0
    %932 = vmatpush1.msra.mxu0 %v49
    %933 = vmatprep.subr.mxu0 0.0
    %934 = vmatpush1.msra.mxu0 %v50
    %935 = vmatprep.subr.mxu0 0.0
    %936 = vmatpush1.msra.mxu0 %v51
    %937 = vmatprep.subr.mxu0 0.0
    %938 = vmatpush1.msra.mxu0 %v52
    %939 = vmatprep.subr.mxu0 0.0
    %940 = vmatpush1.msra.mxu0 0.0
    %941 = vmatprep.subr.mxu0 0.0
    %942 = vmatpush1.msra.mxu0 0.0
    %943 = vmatprep.subr.mxu0 0.0
    %944 = vmatpush1.msra.mxu0 0.0
    %945 = vmatprep.subr.mxu0 0.0
    %946 = vmatpush1.msra.mxu0 0.0
    %947 = vmatprep.subr.mxu0 0.0
    %948 = vmatpush1.msra.mxu0 0.0
    %949 = vmatprep.subr.mxu0 0.0
    %950 = vmatpush1.msra.mxu0 0.0
    %951 = vmatprep.subr.mxu0 0.0
    %952 = vmatpush1.msra.mxu0 0.0
    %953 = vmatprep.subr.mxu0 0.0
    %954 = vmatpush1.msra.mxu0 0.0
    %955 = vmatprep.subr.mxu0 0.0
    %956 = vmatpush1.msra.mxu0 0.0
    %957 = vmatprep.subr.mxu0 0.0
    %958 = vmatpush1.msra.mxu0 0.0
    %959 = vmatprep.subr.mxu0 0.0
    %960 = vmatpush1.msra.mxu0 0.0
    %961 = vmatprep.subr.mxu0 0.0
    %962 = vmatpush1.msra.mxu0 0.0
    %963 = vmatprep.subr.mxu0 0.0
    %964 = vmatpush1.msra.mxu0 0.0
    %965 = vmatprep.subr.mxu0 0.0
    %966 = vmatpush1.msra.mxu0 0.0
    %967 = vmatprep.subr.mxu0 0.0
    %968 = vmatpush1.msra.mxu0 0.0
    %969 = vmatprep.subr.mxu0 0.0
    %970 = vmatpush1.msra.mxu0 0.0
    %971 = vmatprep.subr.mxu0 0.0
    %972 = vmatpush1.msra.mxu0 0.0
    %973 = vmatprep.subr.mxu0 0.0
    %974 = vmatpush1.msra.mxu0 0.0
    %975 = vmatprep.subr.mxu0 0.0
    %976 = vmatpush1.msra.mxu0 0.0
    %977 = vmatprep.subr.mxu0 0.0
    %978 = vmatpush1.msra.mxu0 0.0
    %979 = vmatprep.subr.mxu0 0.0
    %980 = vmatpush1.msra.mxu0 0.0
    %981 = vmatprep.subr.mxu0 0.0
    %982 = vmatpush1.msra.mxu0 0.0
    %983 = vmatprep.subr.mxu0 0.0
    %984 = vmatpush1.msra.mxu0 0.0
    %985 = vmatprep.subr.mxu0 0.0
    %986 = vmatpush1.msra.mxu0 0.0
    %987 = vmatprep.subr.mxu0 0.0
    %988 = vmatpush1.msra.mxu0 0.0
    %989 = vmatprep.subr.mxu0 0.0
    %990 = vmatpush1.msra.mxu0 0.0
    %991 = vmatprep.subr.mxu0 0.0
    %992 = vmatpush1.msra.mxu0 0.0
    %993 = vmatprep.subr.mxu0 0.0
    %994 = vmatpush1.msra.mxu0 0.0
    %995 = vmatprep.mubr.f32.mxu0 0.0
    %996 = vmatmul.mubr.f32.gmra.mrb[0].mxu0 %v929
    %v997 = vpop.f32.mrb[0].mxu0
    %v998 = vadd.f32 %v927, %v997
    %v999 = vpop.f32.mrb[0].mxu0
    %1000 = vdwg.mxu0
    %v1001 = vmul.f32 %v998, 0.5
    %v1002 = vmul.f32 %v998, 0.044715
    %v1003 = vmul.f32 %v1002, %v998
    %v1004 = vmul.f32 %v1003, %v998
    %v1005 = vadd.f32 %v998, %v1004
    %v1006 = vmul.f32 %v1005, 0.7978846
    %v1007 = vtanh.pop %v1006
    %v1008 = vadd.f32 %v1007, 1.0
    %v1009 = vmul.f32 %v1001, %v1008
    %vm1010 = vcmask 523264
    %v1012 = vsel %vm1010, %v1009, 0
    %1014 = vmatprep.subr.mxu0 0.0
    %1015 = vmatpush1.msra.mxu0 %v53
    %1016 = vmatprep.subr.mxu0 0.0
    %1017 = vmatpush1.msra.mxu0 %v54
    %1018 = vmatprep.subr.mxu0 0.0
    %1019 = vmatpush1.msra.mxu0 %v55
    %1020 = vmatprep.subr.mxu0 0.0
    %1021 = vmatpush1.msra.mxu0 %v56
    %1022 = vmatprep.subr.mxu0 0.0
    %1023 = vmatpush1.msra.mxu0 %v57
    %1024 = vmatprep.subr.mxu0 0.0
    %1025 = vmatpush1.msra.mxu0 %v58
    %1026 = vmatprep.subr.mxu0 0.0
    %1027 = vmatpush1.msra.mxu0 %v59
    %1028 = vmatprep.subr.mxu0 0.0
    %1029 = vmatpush1.msra.mxu0 %v60
    %1030 = vmatprep.subr.mxu0 0.0
    %1031 = vmatpush1.msra.mxu0 0.0
    %1032 = vmatprep.subr.mxu0 0.0
    %1033 = vmatpush1.msra.mxu0 0.0
    %1034 = vmatprep.subr.mxu0 0.0
    %1035 = vmatpush1.msra.mxu0 0.0
    %1036 = vmatprep.subr.mxu0 0.0
    %1037 = vmatpush1.msra.mxu0 0.0
    %1038 = vmatprep.subr.mxu0 0.0
    %1039 = vmatpush1.msra.mxu0 0.0
    %1040 = vmatprep.subr.mxu0 0.0
    %1041 = vmatpush1.msra.mxu0 0.0
    %1042 = vmatprep.subr.mxu0 0.0
    %1043 = vmatpush1.msra.mxu0 0.0
    %1044 = vmatprep.subr.mxu0 0.0
    %1045 = vmatpush1.msra.mxu0 0.0
    %1046 = vmatprep.subr.mxu0 0.0
    %1047 = vmatpush1.msra.mxu0 0.0
    %1048 = vmatprep.subr.mxu0 0.0
    %1049 = vmatpush1.msra.mxu0 0.0
    %1050 = vmatprep.subr.mxu0 0.0
    %1051 = vmatpush1.msra.mxu0 0.0
    %1052 = vmatprep.subr.mxu0 0.0
    %1053 = vmatpush1.msra.mxu0 0.0
    %1054 = vmatprep.subr.mxu0 0.0
    %1055 = vmatpush1.msra.mxu0 0.0
    %1056 = vmatprep.subr.mxu0 0.0
    %1057 = vmatpush1.msra.mxu0 0.0
    %1058 = vmatprep.subr.mxu0 0.0
    %1059 = vmatpush1.msra.mxu0 0.0
    %1060 = vmatprep.subr.mxu0 0.0
    %1061 = vmatpush1.msra.mxu0 0.0
    %1062 = vmatprep.subr.mxu0 0.0
    %1063 = vmatpush1.msra.mxu0 0.0
    %1064 = vmatprep.subr.mxu0 0.0
    %1065 = vmatpush1.msra.mxu0 0.0
    %1066 = vmatprep.subr.mxu0 0.0
    %1067 = vmatpush1.msra.mxu0 0.0
    %1068 = vmatprep.subr.mxu0 0.0
    %1069 = vmatpush1.msra.mxu0 0.0
    %1070 = vmatprep.subr.mxu0 0.0
    %1071 = vmatpush1.msra.mxu0 0.0
    %1072 = vmatprep.subr.mxu0 0.0
    %1073 = vmatpush1.msra.mxu0 0.0
    %1074 = vmatprep.subr.mxu0 0.0
    %1075 = vmatpush1.msra.mxu0 0.0
    %1076 = vmatprep.subr.mxu0 0.0
    %1077 = vmatpush1.msra.mxu0 0.0
    %1078 = vmatprep.mubr.f32.mxu0 0.0
    %1079 = vmatmul.mubr.f32.gmra.mrb[0].mxu0 %v1012
    %v1080 = vpop.f32.mrb[0].mxu0
    %v1081 = vadd.f32 0.0, %v1080
    %v1082 = vpop.f32.mrb[0].mxu0
    %1083 = vdwg.mxu0
    %v1084 = vadd.f32 %v900, %v1081
    %v1085 = vlaneseq
    %v1086 = vshrl.u32 %v1085, 7
    %v1087 = vsub.s32 0, %v1086
    %v1088 = vrot.slane %v71, %v1087
    %v1089 = vadd.f32 %v1084, %v1088
    %v1090 = vsel %vm547, %v1089, 0.0
    %1091 = vadd.xlane.f32.xlu0 %v1090
    %v1092 = vpop.xlane.xlu0 %1091
    %v1093 = vmul.f32 %v1092, %v203
    %v1094 = vsub.f32 %v1089, %v1093
    %v1095 = vmul.f32 %v1094, %v1094
    %v1096 = vsel %vm547, %v1095, 0.0
    %1097 = vadd.xlane.f32.xlu0 %v1096
    %v1098 = vpop.xlane.xlu0 %1097
    %v1099 = vmul.f32 %v1098, %v203
    %v1100 = vadd.f32 %v1099, 1e-05
    %v1101 = vrsqrt.pop %v1100
    %v1102 = vmul.f32 %v1094, %v1101
    %v1103 = vlaneseq
    %v1104 = vshrl.u32 %v1103, 7
    %v1105 = vsub.s32 0, %v1104
    %v1106 = vrot.slane %v65, %v1105
    %v1107 = vmul.f32 %v1102, %v1106
    %v1108 = vlaneseq
    %v1109 = vshrl.u32 %v1108, 7
    %v1110 = vsub.s32 0, %v1109
    %v1111 = vrot.slane %v66, %v1110
    %v1112 = vadd.f32 %v1107, %v1111
    %1113 = vst.msk [vmem:[#allocation6] sm:$0x3] %vm547, %v1112
    // Predicated region
    $region22: #{step.1} parent=1 // pred_check
      _
    $region23: #{step.1} parent=1 // pred_check_branch
      %1115 = sbr.rel (0) target = $region25
    $region24: #{step.1} parent=1 // pred_region
      %s1117 = ssub.s32 32, 32
      %1118 = vsyncadd [#allocation5], %s1117
      %s1120 = sshll.u32 [#allocation6], 4
      %s1121 = int_to_ptr.vmem [resolvable:$true] %s1120
      %1123 = dma.vmem_to_hbm [thread:$0]  %s1121, 32, %s4, [#allocation5]
    $region25: #{step.1} parent=1 // pred_fallthru
      _
    // Predicated region
    $region26: #{step.1} parent=1 // pred_check
      _
    $region27: #{step.1} parent=1 // pred_check_branch
      %1125 = sbr.rel (0) target = $region29
    $region28: #{step.1} parent=1 // pred_region
      _
    $region29: #{step.1} parent=1 // pred_fallthru
      _
    // Predicated region
    $region30: #{step.1} parent=1 // pred_check
      _
    $region31: #{step.1} parent=1 // pred_check_branch
      %1127 = sbr.rel (0) target = $region33
    $region32: #{step.1} parent=1 // pred_region
      %1128 = dma.done [#allocation5], 32
    $region33: #{step.1} parent=1 // pred_fallthru
      _
    // Predicated region
    $region34: #{step.1} parent=1 // pred_check
      _
    $region35: #{step.1} parent=1 // pred_check_branch
      %1130 = sbr.rel (0) target = $region37
    $region36: #{step.1} parent=1 // pred_region
      _
    $region37: #{step.1} parent=1 // pred_fallthru
      _
    %1131 = vsyncpa [#allocation4], 1
    %1132 = vsyncpa [#allocation5], 1

</llo_original>
